<compile_context>
chip_gen: v5e
topology: v5e:2x2
jax: 0.10.0
libtpu: 0.0.40
codegen_flags: <defaults>
</compile_context>

<pallas_src>
import functools

import jax
import jax.numpy as jnp
from jax import lax
from jax.experimental import pallas as pl
from jax.experimental.pallas import tpu as pltpu

HIDDEN = 256
BN_EPS = 1e-5
LEAKY_SLOPE = 0.01
LANE = 128
SUBLANE = 8
MAX_TB = 2048                       # batch rows per tile / fused-path threshold
VMEM_LIMIT = 48 * 1024 * 1024       # explicit scoped-VMEM cap (covers v5e default)


def _round_up(n, m):
    return (n + m - 1) // m * m


def _pad2(a, rows, cols):
    return jnp.pad(a, ((0, rows - a.shape[0]), (0, cols - a.shape[1])))


def _leaky(a):
    return jnp.where(a >= 0.0, a, LEAKY_SLOPE * a)


# --------------------------------------------------------------------------- #
# Fused fast path: whole network in one gridless call (batch fits in one tile)
# --------------------------------------------------------------------------- #
def _fused_kernel(x_ref, w1_ref, g1_ref, be1_ref, w2_ref, g2_ref, be2_ref,
                  w3_ref, b3_ref, o_ref, *, n_valid, bp):
    inv_n = 1.0 / float(n_valid)

    def bn(h, g_ref, be_ref):
        s = jnp.sum(h, axis=0, keepdims=True)
        q = jnp.sum(h * h, axis=0, keepdims=True)
        mean = s * inv_n
        var = jnp.maximum(q * inv_n - mean * mean, 0.0)
        scale = lax.rsqrt(var + BN_EPS) * g_ref[...]     # gamma folded into scale
        shift = be_ref[...] - mean * scale
        return h * scale + shift

    # Layer 1 (bias cancelled by BN). Zero-padded x rows give zero h1 rows, so
    # the stats sums are already over the valid rows only.
    h1 = jnp.dot(x_ref[...].astype(jnp.bfloat16), w1_ref[...],
                 preferred_element_type=jnp.float32)
    a1 = _leaky(bn(h1, g1_ref, be1_ref))
    if n_valid < bp:                                      # static: only if padded
        row = lax.broadcasted_iota(jnp.int32, (bp, 1), 0)
        a1 = jnp.where(row < n_valid, a1, 0.0)            # keep h2 stats clean

    # Layer 2
    h2 = jnp.dot(a1.astype(jnp.bfloat16), w2_ref[...],
                 preferred_element_type=jnp.float32)
    a2 = _leaky(bn(h2, g2_ref, be2_ref))

    # Layer 3 (real bias)
    out = jnp.dot(a2.astype(jnp.bfloat16), w3_ref[...],
                  preferred_element_type=jnp.float32)
    o_ref[...] = out + b3_ref[...]


# --------------------------------------------------------------------------- #
# Tiled kernel 1: h1 = x @ W1 ; accumulate per-feature sum / sum-of-squares.
# --------------------------------------------------------------------------- #
def _lin_stats_kernel(x_ref, w_ref, h_ref, sum_ref, ssq_ref):
    @pl.when(pl.program_id(0) == 0)
    def _():
        sum_ref[...] = jnp.zeros_like(sum_ref)
        ssq_ref[...] = jnp.zeros_like(ssq_ref)

    h = jnp.dot(x_ref[...].astype(jnp.bfloat16), w_ref[...],
                preferred_element_type=jnp.float32)
    h_ref[...] = h.astype(jnp.bfloat16)                   # bf16 intermediate in HBM
    # Padded x rows are zero -> zero h rows -> no mask needed for the stats.
    sum_ref[...] += jnp.sum(h, axis=0, keepdims=True)
    ssq_ref[...] += jnp.sum(h * h, axis=0, keepdims=True)


# --------------------------------------------------------------------------- #
# Tiled kernel 2: a = leaky(bn(h1)); h2 = a @ W2 ; accumulate stats of h2.
# BN scale/shift hoisted into VMEM scratch (computed once at i == 0; the batch
# axis is "arbitrary", i.e. serial, so this is safe).
# --------------------------------------------------------------------------- #
def _bn_lin_stats_kernel(h_ref, s_in_ref, q_in_ref, g_ref, be_ref, w_ref,
                         h_out_ref, sum_ref, ssq_ref, scale_ref, shift_ref,
                         *, tb, n_valid, bp):
    i = pl.program_id(0)

    @pl.when(i == 0)
    def _():
        inv_n = 1.0 / float(n_valid)
        mean = s_in_ref[...] * inv_n
        var = jnp.maximum(q_in_ref[...] * inv_n - mean * mean, 0.0)
        sc = lax.rsqrt(var + BN_EPS) * g_ref[...]
        scale_ref[...] = sc
        shift_ref[...] = be_ref[...] - mean * sc
        sum_ref[...] = jnp.zeros_like(sum_ref)
        ssq_ref[...] = jnp.zeros_like(ssq_ref)

    a = _leaky(h_ref[...].astype(jnp.float32) * scale_ref[...] + shift_ref[...])
    if n_valid < bp:                                      # static: only if padded
        row = i * tb + lax.broadcasted_iota(jnp.int32, (tb, 1), 0)
        a = jnp.where(row < n_valid, a, 0.0)              # padded h2 rows -> exactly 0

    h = jnp.dot(a.astype(jnp.bfloat16), w_ref[...],
                preferred_element_type=jnp.float32)
    h_out_ref[...] = h.astype(jnp.bfloat16)
    sum_ref[...] += jnp.sum(h, axis=0, keepdims=True)
    ssq_ref[...] += jnp.sum(h * h, axis=0, keepdims=True)


# --------------------------------------------------------------------------- #
# Tiled kernel 3: a = leaky(bn(h2)); out = a @ W3 + b3.
# No cross-tile dependence -> batch axis "parallel"; scale/shift recomputed per
# step (a few (1,256) ops + one EUP rsqrt, negligible) so megacore split is safe.
# --------------------------------------------------------------------------- #
def _bn_lin_out_kernel(h_ref, s_in_ref, q_in_ref, g_ref, be_ref, w_ref, b_ref,
                       o_ref, *, n_valid):
    inv_n = 1.0 / float(n_valid)
    mean = s_in_ref[...] * inv_n
    var = jnp.maximum(q_in_ref[...] * inv_n - mean * mean, 0.0)
    scale = lax.rsqrt(var + BN_EPS) * g_ref[...]
    shift = be_ref[...] - mean * scale

    a = _leaky(h_ref[...].astype(jnp.float32) * scale + shift)
    out = jnp.dot(a.astype(jnp.bfloat16), w_ref[...],
                  preferred_element_type=jnp.float32)
    o_ref[...] = out + b_ref[...]


# --------------------------------------------------------------------------- #
# One-time parameter prep (hoisted out of the jitted forward): bf16 casts and
# lane-dense padding of the last layer.
# --------------------------------------------------------------------------- #
def prepare_params(params):
    out_num = params["b3"].shape[1]
    op = _round_up(out_num, LANE)
    return {
        "w1": params["w1"].astype(jnp.bfloat16),                    # (F, 256)
        "w2": params["w2"].astype(jnp.bfloat16),                    # (256, 256)
        "w3p": _pad2(params["w3"].astype(jnp.bfloat16), HIDDEN, op),  # (256, Op)
        "b3p": _pad2(params["b3"], 1, op),                          # (1, Op) f32
        "g1": params["g1"], "be1": params["be1"],
        "g2": params["g2"], "be2": params["be2"],
    }


# --------------------------------------------------------------------------- #
# Forward
# --------------------------------------------------------------------------- #
@functools.partial(jax.jit, static_argnames=("out_num", "max_tb"))
def posemap_bn(x, prepped, *, out_num, max_tb=MAX_TB):
    """x: (B, input_num) float32. Returns (B, output_num) float32."""
    B, F = x.shape
    Op = prepped["w3p"].shape[1]
    f32 = jnp.float32
    cp_serial = pltpu.CompilerParams(dimension_semantics=("arbitrary",),
                                     vmem_limit_bytes=VMEM_LIMIT)

    # ------------------------- fused small-batch path ------------------------ #
    if B <= max_tb:
        Bp = _round_up(B, SUBLANE)
        x_p = jnp.pad(x, ((0, Bp - B), (0, 0))) if Bp != B else x
        out_p = pl.pallas_call(
            functools.partial(_fused_kernel, n_valid=B, bp=Bp),
            out_shape=jax.ShapeDtypeStruct((Bp, Op), f32),
            compiler_params=pltpu.CompilerParams(vmem_limit_bytes=VMEM_LIMIT),
            cost_estimate=pl.CostEstimate(
                flops=2 * Bp * HIDDEN * (F + HIDDEN + Op) + 16 * Bp * HIDDEN,
                transcendentals=2 * HIDDEN,
                bytes_accessed=Bp * F * 4 + F * HIDDEN * 2 + 2 * HIDDEN * HIDDEN
                + HIDDEN * Op * 2 + Bp * Op * 4),
        )(x_p, prepped["w1"], prepped["g1"], prepped["be1"], prepped["w2"],
          prepped["g2"], prepped["be2"], prepped["w3p"], prepped["b3p"])
        return out_p[:B, :out_num]

    # ----------------------------- tiled pipeline ---------------------------- #
    tb = max_tb
    Bp = _round_up(B, tb)
    nb = Bp // tb
    x_p = jnp.pad(x, ((0, Bp - B), (0, 0))) if Bp != B else x

    row_spec = pl.BlockSpec((1, HIDDEN), lambda i: (0, 0))     # grid-invariant (1,256)
    tile_h = pl.BlockSpec((tb, HIDDEN), lambda i: (i, 0))      # per-tile activations

    # ---- call 1: x @ W1 + global stats of h1 (batch axis = stats reduction) ----
    h1, s1, q1 = pl.pallas_call(
        _lin_stats_kernel,
        grid=(nb,),
        in_specs=(pl.BlockSpec((tb, F), lambda i: (i, 0)),
                  pl.BlockSpec((F, HIDDEN), lambda i: (0, 0))),
        out_specs=(tile_h, row_spec, row_spec),
        out_shape=(jax.ShapeDtypeStruct((Bp, HIDDEN), jnp.bfloat16),
                   jax.ShapeDtypeStruct((1, HIDDEN), f32),
                   jax.ShapeDtypeStruct((1, HIDDEN), f32)),
        compiler_params=cp_serial,
        cost_estimate=pl.CostEstimate(
            flops=2 * Bp * F * HIDDEN + 3 * Bp * HIDDEN,
            transcendentals=0,
            bytes_accessed=Bp * F * 4 + F * HIDDEN * 2 + Bp * HIDDEN * 2
            + 2 * HIDDEN * 4),
    )(x_p, prepped["w1"])

    # ---- call 2: bn1 + leaky + @W2 + global stats of h2 ----
    h2, s2, q2 = pl.pallas_call(
        functools.partial(_bn_lin_stats_kernel, tb=tb, n_valid=B, bp=Bp),
        grid=(nb,),
        in_specs=(tile_h, row_spec, row_spec, row_spec, row_spec,
                  pl.BlockSpec((HIDDEN, HIDDEN), lambda i: (0, 0))),
        out_specs=(tile_h, row_spec, row_spec),
        out_shape=(jax.ShapeDtypeStruct((Bp, HIDDEN), jnp.bfloat16),
                   jax.ShapeDtypeStruct((1, HIDDEN), f32),
                   jax.ShapeDtypeStruct((1, HIDDEN), f32)),
        scratch_shapes=[pltpu.VMEM((1, HIDDEN), f32),
                        pltpu.VMEM((1, HIDDEN), f32)],
        compiler_params=cp_serial,
        cost_estimate=pl.CostEstimate(
            flops=2 * Bp * HIDDEN * HIDDEN + 8 * Bp * HIDDEN,
            transcendentals=HIDDEN,
            bytes_accessed=2 * Bp * HIDDEN * 2 + HIDDEN * HIDDEN * 2
            + 8 * HIDDEN * 4),
    )(h1, s1, q1, prepped["g1"], prepped["be1"], prepped["w2"])

    # ---- call 3: bn2 + leaky + @W3 + b3 (no cross-tile dependence -> parallel) ----
    out_p = pl.pallas_call(
        functools.partial(_bn_lin_out_kernel, n_valid=B),
        grid=(nb,),
        in_specs=(tile_h, row_spec, row_spec, row_spec, row_spec,
                  pl.BlockSpec((HIDDEN, Op), lambda i: (0, 0)),
                  pl.BlockSpec((1, Op), lambda i: (0, 0))),
        out_specs=pl.BlockSpec((tb, Op), lambda i: (i, 0)),
        out_shape=jax.ShapeDtypeStruct((Bp, Op), f32),
        compiler_params=pltpu.CompilerParams(dimension_semantics=("parallel",),
                                             vmem_limit_bytes=VMEM_LIMIT),
        cost_estimate=pl.CostEstimate(
            flops=2 * Bp * HIDDEN * Op + 8 * Bp * HIDDEN,
            transcendentals=HIDDEN,
            bytes_accessed=Bp * HIDDEN * 2 + HIDDEN * Op * 2 + Bp * Op * 4
            + 5 * HIDDEN * 4),
    )(h2, s2, q2, prepped["g2"], prepped["be2"], prepped["w3p"], prepped["b3p"])

    return out_p[:B, :out_num]


# --------------------------------------------------------------------------- #
# Parameter init (PyTorch-style uniform +-1/sqrt(fan_in)); weights kept as
# (in_features, out_features) so the kernel computes x @ W directly.
# --------------------------------------------------------------------------- #
def init_params(key, input_num, output_num):
    ks = jax.random.split(key, 6)

    def lin(kw, kb, fan_in, fan_out):
        bound = 1.0 / jnp.sqrt(jnp.float32(fan_in))
        w = jax.random.uniform(kw, (fan_in, fan_out), jnp.float32, -bound, bound)
        b = jax.random.uniform(kb, (1, fan_out), jnp.float32, -bound, bound)
        return w, b

    w1, b1 = lin(ks[0], ks[1], input_num, HIDDEN)
    w2, b2 = lin(ks[2], ks[3], HIDDEN, HIDDEN)
    w3, b3 = lin(ks[4], ks[5], HIDDEN, output_num)

    ones = jnp.ones((1, HIDDEN), jnp.float32)   # BN gamma default
    zeros = jnp.zeros((1, HIDDEN), jnp.float32)  # BN beta default

    # b1/b2 are only used by the pure-JAX reference: training-mode BN cancels them.
    return {"w1": w1, "b1": b1, "g1": ones, "be1": zeros,
            "w2": w2, "b2": b2, "g2": ones, "be2": zeros,
            "w3": w3, "b3": b3}


def _reference(x, p):
    """Pure-JAX reference (same bf16-matmul / f32-accumulate precision policy)."""
    def mm(a, w):
        return jnp.dot(a.astype(jnp.bfloat16), w.astype(jnp.bfloat16),
                       preferred_element_type=jnp.float32)

    def bn_leaky(h, g, b):
        m = jnp.mean(h, axis=0, keepdims=True)
        v = jnp.mean((h - m) ** 2, axis=0, keepdims=True)
        h = (h - m) / jnp.sqrt(v + BN_EPS) * g + b
        return jnp.where(h >= 0, h, LEAKY_SLOPE * h)

    h = bn_leaky(mm(x, p["w1"]) + p["b1"], p["g1"], p["be1"])   # + b1 kept: BN cancels it
    h = bn_leaky(mm(h, p["w2"]) + p["b2"], p["g2"], p["be2"])
    return mm(h, p["w3"]) + p["b3"]


if __name__ == "__main__":
    input_num = 32      # e.g. flattened pose keypoints
    output_num = 16

    key = jax.random.PRNGKey(0)
    kx1, kx2, kp = jax.random.split(key, 3)
    params = init_params(kp, input_num, output_num)
    prepped = prepare_params(params)

    # 1) small batch -> fused single-call fast path
    x1 = jax.random.normal(kx1, (8, input_num), jnp.float32)
    out1 = jax.block_until_ready(posemap_bn(x1, prepped, out_num=output_num))
    ref1 = _reference(x1, params)
    assert out1.shape == (8, output_num)
    assert bool(jnp.allclose(out1, ref1, atol=2e-2, rtol=2e-2)), \
        f"fused path: max abs err {jnp.max(jnp.abs(out1 - ref1))}"

    # 2) larger batch with a tiny tile -> exercises the 3-call tiled pipeline,
    #    bf16 intermediates, accumulator stats and the padded-tail masking.
    x2 = jax.random.normal(kx2, (20, input_num), jnp.float32)
    out2 = jax.block_until_ready(posemap_bn(x2, prepped, out_num=output_num, max_tb=8))
    ref2 = _reference(x2, params)
    assert out2.shape == (20, output_num)
    assert bool(jnp.allclose(out2, ref2, atol=2e-2, rtol=2e-2)), \
        f"tiled path: max abs err {jnp.max(jnp.abs(out2 - ref2))}"

    print("KERNEL_OK")
</pallas_src>

<mosaic_0001>
module attributes {stable_mosaic.version = 11 : i64} {
  func.func @_fused_kernel(%arg0: memref<8x32xf32, #tpu.memory_space<vmem>>, %arg1: memref<32x256xbf16, #tpu.memory_space<vmem>>, %arg2: memref<1x256xf32, #tpu.memory_space<vmem>>, %arg3: memref<1x256xf32, #tpu.memory_space<vmem>>, %arg4: memref<256x256xbf16, #tpu.memory_space<vmem>>, %arg5: memref<1x256xf32, #tpu.memory_space<vmem>>, %arg6: memref<1x256xf32, #tpu.memory_space<vmem>>, %arg7: memref<256x128xbf16, #tpu.memory_space<vmem>>, %arg8: memref<1x128xf32, #tpu.memory_space<vmem>>, %arg9: memref<8x128xf32, #tpu.memory_space<vmem>>) attributes {dimension_semantics = [], scalar_prefetch = 0 : i64, scratch_operands = 0 : i64, tpu.core_type = #tpu.core_type<tc>} {
    %c0 = arith.constant 0 : index
    %c0_0 = arith.constant 0 : index
    %0 = vector.load %arg0[%c0, %c0_0] : memref<8x32xf32, #tpu.memory_space<vmem>>, vector<8x32xf32>
    %1 = arith.truncf %0 : vector<8x32xf32> to vector<8x32xbf16>
    %c0_1 = arith.constant 0 : index
    %c0_2 = arith.constant 0 : index
    %2 = vector.load %arg1[%c0_1, %c0_2] : memref<32x256xbf16, #tpu.memory_space<vmem>>, vector<32x256xbf16>
    %cst = arith.constant dense<0.000000e+00> : vector<8x256xf32>
    %3 = tpu.matmul %1, %2, %cst {dimension_numbers = #tpu.dot_dimension_numbers<[1], [0], [0], [1], [0, 0, 1, 1], [], []>} : vector<8x32xbf16>, vector<32x256xbf16>, vector<8x256xf32> -> vector<8x256xf32>
    %cst_3 = arith.constant dense<0.000000e+00> : vector<256xf32>
    %4 = vector.multi_reduction <add>, %3, %cst_3 [0] : vector<8x256xf32> to vector<256xf32>
    %5 = vector.shape_cast %4 : vector<256xf32> to vector<1x256xf32>
    %6 = arith.mulf %3, %3 : vector<8x256xf32>
    %cst_4 = arith.constant dense<0.000000e+00> : vector<256xf32>
    %7 = vector.multi_reduction <add>, %6, %cst_4 [0] : vector<8x256xf32> to vector<256xf32>
    %8 = vector.shape_cast %7 : vector<256xf32> to vector<1x256xf32>
    %cst_5 = arith.constant 1.250000e-01 : f32
    %9 = vector.broadcast %cst_5 : f32 to vector<1x256xf32>
    %10 = arith.mulf %5, %9 : vector<1x256xf32>
    %cst_6 = arith.constant 1.250000e-01 : f32
    %11 = vector.broadcast %cst_6 : f32 to vector<1x256xf32>
    %12 = arith.mulf %8, %11 : vector<1x256xf32>
    %13 = arith.mulf %10, %10 : vector<1x256xf32>
    %14 = arith.subf %12, %13 : vector<1x256xf32>
    %cst_7 = arith.constant 0.000000e+00 : f32
    %15 = vector.broadcast %cst_7 : f32 to vector<1x256xf32>
    %16 = arith.maximumf %14, %15 : vector<1x256xf32>
    %cst_8 = arith.constant 9.99999974E-6 : f32
    %17 = vector.broadcast %cst_8 : f32 to vector<1x256xf32>
    %18 = arith.addf %16, %17 : vector<1x256xf32>
    %19 = math.rsqrt %18 : vector<1x256xf32>
    %c0_9 = arith.constant 0 : index
    %c0_10 = arith.constant 0 : index
    %20 = vector.load %arg2[%c0_9, %c0_10] : memref<1x256xf32, #tpu.memory_space<vmem>>, vector<1x256xf32>
    %21 = arith.mulf %19, %20 : vector<1x256xf32>
    %c0_11 = arith.constant 0 : index
    %c0_12 = arith.constant 0 : index
    %22 = vector.load %arg3[%c0_11, %c0_12] : memref<1x256xf32, #tpu.memory_space<vmem>>, vector<1x256xf32>
    %23 = arith.mulf %10, %21 : vector<1x256xf32>
    %24 = arith.subf %22, %23 : vector<1x256xf32>
    %25 = vector.broadcast %21 : vector<1x256xf32> to vector<8x256xf32>
    %26 = arith.mulf %3, %25 : vector<8x256xf32>
    %27 = vector.broadcast %24 : vector<1x256xf32> to vector<8x256xf32>
    %28 = arith.addf %26, %27 : vector<8x256xf32>
    %cst_13 = arith.constant 0.000000e+00 : f32
    %29 = vector.broadcast %cst_13 : f32 to vector<8x256xf32>
    %30 = arith.cmpf oge, %28, %29 : vector<8x256xf32>
    %cst_14 = arith.constant 0.00999999977 : f32
    %31 = vector.broadcast %cst_14 : f32 to vector<8x256xf32>
    %32 = arith.mulf %31, %28 : vector<8x256xf32>
    %33 = arith.select %30, %28, %32 : vector<8x256xi1>, vector<8x256xf32>
    %34 = arith.truncf %33 : vector<8x256xf32> to vector<8x256xbf16>
    %c0_15 = arith.constant 0 : index
    %c0_16 = arith.constant 0 : index
    %35 = vector.load %arg4[%c0_15, %c0_16] : memref<256x256xbf16, #tpu.memory_space<vmem>>, vector<256x256xbf16>
    %cst_17 = arith.constant dense<0.000000e+00> : vector<8x256xf32>
    %36 = tpu.matmul %34, %35, %cst_17 {dimension_numbers = #tpu.dot_dimension_numbers<[1], [0], [0], [1], [0, 0, 1, 1], [], []>} : vector<8x256xbf16>, vector<256x256xbf16>, vector<8x256xf32> -> vector<8x256xf32>
    %cst_18 = arith.constant dense<0.000000e+00> : vector<256xf32>
    %37 = vector.multi_reduction <add>, %36, %cst_18 [0] : vector<8x256xf32> to vector<256xf32>
    %38 = vector.shape_cast %37 : vector<256xf32> to vector<1x256xf32>
    %39 = arith.mulf %36, %36 : vector<8x256xf32>
    %cst_19 = arith.constant dense<0.000000e+00> : vector<256xf32>
    %40 = vector.multi_reduction <add>, %39, %cst_19 [0] : vector<8x256xf32> to vector<256xf32>
    %41 = vector.shape_cast %40 : vector<256xf32> to vector<1x256xf32>
    %cst_20 = arith.constant 1.250000e-01 : f32
    %42 = vector.broadcast %cst_20 : f32 to vector<1x256xf32>
    %43 = arith.mulf %38, %42 : vector<1x256xf32>
    %cst_21 = arith.constant 1.250000e-01 : f32
    %44 = vector.broadcast %cst_21 : f32 to vector<1x256xf32>
    %45 = arith.mulf %41, %44 : vector<1x256xf32>
    %46 = arith.mulf %43, %43 : vector<1x256xf32>
    %47 = arith.subf %45, %46 : vector<1x256xf32>
    %cst_22 = arith.constant 0.000000e+00 : f32
    %48 = vector.broadcast %cst_22 : f32 to vector<1x256xf32>
    %49 = arith.maximumf %47, %48 : vector<1x256xf32>
    %cst_23 = arith.constant 9.99999974E-6 : f32
    %50 = vector.broadcast %cst_23 : f32 to vector<1x256xf32>
    %51 = arith.addf %49, %50 : vector<1x256xf32>
    %52 = math.rsqrt %51 : vector<1x256xf32>
    %c0_24 = arith.constant 0 : index
    %c0_25 = arith.constant 0 : index
    %53 = vector.load %arg5[%c0_24, %c0_25] : memref<1x256xf32, #tpu.memory_space<vmem>>, vector<1x256xf32>
    %54 = arith.mulf %52, %53 : vector<1x256xf32>
    %c0_26 = arith.constant 0 : index
    %c0_27 = arith.constant 0 : index
    %55 = vector.load %arg6[%c0_26, %c0_27] : memref<1x256xf32, #tpu.memory_space<vmem>>, vector<1x256xf32>
    %56 = arith.mulf %43, %54 : vector<1x256xf32>
    %57 = arith.subf %55, %56 : vector<1x256xf32>
    %58 = vector.broadcast %54 : vector<1x256xf32> to vector<8x256xf32>
    %59 = arith.mulf %36, %58 : vector<8x256xf32>
    %60 = vector.broadcast %57 : vector<1x256xf32> to vector<8x256xf32>
    %61 = arith.addf %59, %60 : vector<8x256xf32>
    %cst_28 = arith.constant 0.000000e+00 : f32
    %62 = vector.broadcast %cst_28 : f32 to vector<8x256xf32>
    %63 = arith.cmpf oge, %61, %62 : vector<8x256xf32>
    %cst_29 = arith.constant 0.00999999977 : f32
    %64 = vector.broadcast %cst_29 : f32 to vector<8x256xf32>
    %65 = arith.mulf %64, %61 : vector<8x256xf32>
    %66 = arith.select %63, %61, %65 : vector<8x256xi1>, vector<8x256xf32>
    %67 = arith.truncf %66 : vector<8x256xf32> to vector<8x256xbf16>
    %c0_30 = arith.constant 0 : index
    %c0_31 = arith.constant 0 : index
    %68 = vector.load %arg7[%c0_30, %c0_31] : memref<256x128xbf16, #tpu.memory_space<vmem>>, vector<256x128xbf16>
    %cst_32 = arith.constant dense<0.000000e+00> : vector<8x128xf32>
    %69 = tpu.matmul %67, %68, %cst_32 {dimension_numbers = #tpu.dot_dimension_numbers<[1], [0], [0], [1], [0, 0, 1, 1], [], []>} : vector<8x256xbf16>, vector<256x128xbf16>, vector<8x128xf32> -> vector<8x128xf32>
    %c0_33 = arith.constant 0 : index
    %c0_34 = arith.constant 0 : index
    %70 = vector.load %arg8[%c0_33, %c0_34] : memref<1x128xf32, #tpu.memory_space<vmem>>, vector<1x128xf32>
    %71 = vector.broadcast %70 : vector<1x128xf32> to vector<8x128xf32>
    %72 = arith.addf %69, %71 : vector<8x128xf32>
    %c0_35 = arith.constant 0 : index
    %c0_36 = arith.constant 0 : index
    %73 = vector.load %arg9[%c0_35, %c0_36] : memref<8x128xf32, #tpu.memory_space<vmem>>, vector<8x128xf32>
    tpu.vector_store %arg9[%c0_35, %c0_36], %72 {strides = array<i32>} : memref<8x128xf32, #tpu.memory_space<vmem>>, vector<8x128xf32>,
    return
  }
}

</mosaic_0001>

<llo_original>
// kernel: posemap_bn.1
$region0: #{posemap_bn.1}
  #allocation0 [shape = 'u32[]', space=smem, size = 0x4, offset = 0x4, fixed_abs, tag = 'smem constant byte address 0x4 - core index']
  #allocation1 [shape = 'u32[72,128]{1,0:T(1,128)}', space=vmem, size = 0x9000, scoped, tag = 'internal scratch']
  %s0 = inlined_call_operand.hbm [shape: f32[8,32], index: 0, kind: input, shape index: {}]
  %s1 = inlined_call_operand.hbm [shape: bf16[32,256], index: 1, kind: input, shape index: {}]
  %s2 = inlined_call_operand.vmem [shape: f32[1,256], index: 2, kind: input, shape index: {}]
  %s3 = inlined_call_operand.hbm [shape: f32[1,256], index: 3, kind: input, shape index: {}]
  %s4 = inlined_call_operand.hbm [shape: bf16[256,256], index: 4, kind: input, shape index: {}]
  %s5 = inlined_call_operand.vmem [shape: f32[1,256], index: 5, kind: input, shape index: {}]
  %s6 = inlined_call_operand.hbm [shape: f32[1,256], index: 6, kind: input, shape index: {}]
  %s7 = inlined_call_operand.hbm [shape: bf16[256,128], index: 7, kind: input, shape index: {}]
  %s8 = inlined_call_operand.hbm [shape: f32[1,128], index: 8, kind: input, shape index: {}]
  %s9 = inlined_call_operand.hbm [shape: f32[8,128], index: 9, kind: output, shape index: {}]
  %s10 = sld [smem:[#allocation0]]
  $region74: #{posemap_bn.1} parent=0
    _
  %s12 = ssub.s32 1, %s10
  %s13 = scalar_select 0, %s12, %s10
  $region1: #{posemap_bn.1} parent=0
    #allocation2 [shape = 'u8[4096]{0}', space=vmem, size = 0x1000, scoped, tag = 'input window, operand 0, single buffered']
    #allocation3 [shape = 's32[1]{0}', space=sflag, size = 0x4, scoped, tag = 'scoped memory for posemap_bn.1']
    #allocation4 [shape = 's32[1]{0}', space=sflag, size = 0x4, scoped, tag = 'scoped memory for posemap_bn.1']
    #allocation5 [shape = 'u8[16384]{0}', space=vmem, size = 0x4000, scoped, tag = 'input window, operand 1, single buffered']
    #allocation6 [shape = 's32[1]{0}', space=sflag, size = 0x4, scoped, tag = 'scoped memory for posemap_bn.1']
    #allocation7 [shape = 'u8[1024]{0}', space=vmem, size = 0x400, scoped, tag = 'input window, operand 3, single buffered']
    #allocation8 [shape = 'u8[131072]{0}', space=vmem, size = 0x20000, scoped, tag = 'input window, operand 4, single buffered']
    #allocation9 [shape = 's32[1]{0}', space=sflag, size = 0x4, scoped, tag = 'scoped memory for posemap_bn.1']
    #allocation10 [shape = 'u8[1024]{0}', space=vmem, size = 0x400, scoped, tag = 'input window, operand 6, single buffered']
    #allocation11 [shape = 'u8[65536]{0}', space=vmem, size = 0x10000, scoped, tag = 'input window, operand 7, single buffered']
    #allocation12 [shape = 's32[1]{0}', space=sflag, size = 0x4, scoped, tag = 'scoped memory for posemap_bn.1']
    #allocation13 [shape = 'u8[512]{0}', space=vmem, size = 0x400, scoped, tag = 'input window, operand 8, single buffered']
    #allocation14 [shape = 'u8[4096]{0}', space=vmem, size = 0x1000, scoped, tag = 'output window, operand 0, single buffered']
    %14 = vsyncpa [#allocation3], 0
    %15 = vsyncpa [#allocation6], 0
    %16 = vsyncpa [#allocation9], 0
    %17 = vsyncpa [#allocation12], 0
    %18 = vsyncpa [#allocation4], 0
    // Predicated region
    $region2: #{posemap_bn.1} parent=1 // pred_check
      _
    $region3: #{posemap_bn.1} parent=1 // pred_check_branch
      %20 = sbr.rel (0) target = $region5
    $region4: #{posemap_bn.1} parent=1 // pred_region
      %22 = vsyncadd [#allocation3], 0
      %s24 = sshll.u32 %s0, 4
      %s25 = int_to_ptr.hbm [resolvable:$true] %s24
      %s26 = sshll.u32 [#allocation2], 4
      %s27 = int_to_ptr.vmem [resolvable:$true] %s26
      %29 = dma.hbm_to_vmem [thread:$0]  %s25, 128, %s27, [#allocation3]
    $region5: #{posemap_bn.1} parent=1 // pred_fallthru
      _
    // Predicated region
    $region6: #{posemap_bn.1} parent=1 // pred_check
      _
    $region7: #{posemap_bn.1} parent=1 // pred_check_branch
      %31 = sbr.rel (0) target = $region9
    $region8: #{posemap_bn.1} parent=1 // pred_region
      %33 = vsyncadd [#allocation6], 0
      %s34 = sshll.u32 %s1, 4
      %s35 = int_to_ptr.hbm [resolvable:$true] %s34
      %s36 = sshll.u32 [#allocation5], 4
      %s37 = int_to_ptr.vmem [resolvable:$true] %s36
      %42 = dma.hbm_to_vmem [thread:$0]  %s35, 512, %s37, [#allocation6], 128, 128, 8
    $region9: #{posemap_bn.1} parent=1 // pred_fallthru
      _
    // Predicated region
    $region10: #{posemap_bn.1} parent=1 // pred_check
      _
    $region11: #{posemap_bn.1} parent=1 // pred_check_branch
      %44 = sbr.rel (0) target = $region13
    $region12: #{posemap_bn.1} parent=1 // pred_region
      _
    $region13: #{posemap_bn.1} parent=1 // pred_fallthru
      _
    // Predicated region
    $region14: #{posemap_bn.1} parent=1 // pred_check
      _
    $region15: #{posemap_bn.1} parent=1 // pred_check_branch
      %46 = sbr.rel (0) target = $region17
    $region16: #{posemap_bn.1} parent=1 // pred_region
      %48 = vsyncadd [#allocation6], 0
      %s50 = sshll.u32 %s3, 4
      %s51 = int_to_ptr.hbm [resolvable:$true] %s50
      %s52 = sshll.u32 [#allocation7], 4
      %s53 = int_to_ptr.vmem [resolvable:$true] %s52
      %55 = dma.hbm_to_vmem [thread:$0]  %s51, 32, %s53, [#allocation6]
    $region17: #{posemap_bn.1} parent=1 // pred_fallthru
      _
    // Predicated region
    $region18: #{posemap_bn.1} parent=1 // pred_check
      _
    $region19: #{posemap_bn.1} parent=1 // pred_check_branch
      %57 = sbr.rel (0) target = $region21
    $region20: #{posemap_bn.1} parent=1 // pred_region
      %59 = vsyncadd [#allocation9], 0
      %s60 = sshll.u32 %s4, 4
      %s61 = int_to_ptr.hbm [resolvable:$true] %s60
      %s62 = sshll.u32 [#allocation8], 4
      %s63 = int_to_ptr.vmem [resolvable:$true] %s62
      %68 = dma.hbm_to_vmem [thread:$0]  %s61, 4096, %s63, [#allocation9], 128, 128, 8
    $region21: #{posemap_bn.1} parent=1 // pred_fallthru
      _
    // Predicated region
    $region22: #{posemap_bn.1} parent=1 // pred_check
      _
    $region23: #{posemap_bn.1} parent=1 // pred_check_branch
      %70 = sbr.rel (0) target = $region25
    $region24: #{posemap_bn.1} parent=1 // pred_region
      _
    $region25: #{posemap_bn.1} parent=1 // pred_fallthru
      _
    // Predicated region
    $region26: #{posemap_bn.1} parent=1 // pred_check
      _
    $region27: #{posemap_bn.1} parent=1 // pred_check_branch
      %72 = sbr.rel (0) target = $region29
    $region28: #{posemap_bn.1} parent=1 // pred_region
      %74 = vsyncadd [#allocation9], 0
      %s76 = sshll.u32 %s6, 4
      %s77 = int_to_ptr.hbm [resolvable:$true] %s76
      %s78 = sshll.u32 [#allocation10], 4
      %s79 = int_to_ptr.vmem [resolvable:$true] %s78
      %81 = dma.hbm_to_vmem [thread:$0]  %s77, 32, %s79, [#allocation9]
    $region29: #{posemap_bn.1} parent=1 // pred_fallthru
      _
    // Predicated region
    $region30: #{posemap_bn.1} parent=1 // pred_check
      _
    $region31: #{posemap_bn.1} parent=1 // pred_check_branch
      %83 = sbr.rel (0) target = $region33
    $region32: #{posemap_bn.1} parent=1 // pred_region
      %85 = vsyncadd [#allocation12], 0
      %s86 = sshll.u32 %s7, 4
      %s87 = int_to_ptr.hbm [resolvable:$true] %s86
      %s88 = sshll.u32 [#allocation11], 4
      %s89 = int_to_ptr.vmem [resolvable:$true] %s88
      %94 = dma.hbm_to_vmem [thread:$0]  %s87, 2048, %s89, [#allocation12], 64, 64, 4
    $region33: #{posemap_bn.1} parent=1 // pred_fallthru
      _
    // Predicated region
    $region34: #{posemap_bn.1} parent=1 // pred_check
      _
    $region35: #{posemap_bn.1} parent=1 // pred_check_branch
      %96 = sbr.rel (0) target = $region37
    $region36: #{posemap_bn.1} parent=1 // pred_region
      %98 = vsyncadd [#allocation12], 0
      %s100 = sshll.u32 %s8, 4
      %s101 = int_to_ptr.hbm [resolvable:$true] %s100
      %s102 = sshll.u32 [#allocation13], 4
      %s103 = int_to_ptr.vmem [resolvable:$true] %s102
      %105 = dma.hbm_to_vmem [thread:$0]  %s101, 16, %s103, [#allocation12]
    $region37: #{posemap_bn.1} parent=1 // pred_fallthru
      _
    // Predicated region
    $region38: #{posemap_bn.1} parent=1 // pred_check
      _
    $region39: #{posemap_bn.1} parent=1 // pred_check_branch
      %107 = sbr.rel (0) target = $region41
    $region40: #{posemap_bn.1} parent=1 // pred_region
      %109 = dma.done [#allocation3], 128
    $region41: #{posemap_bn.1} parent=1 // pred_fallthru
      _
    // Predicated region
    $region42: #{posemap_bn.1} parent=1 // pred_check
      _
    $region43: #{posemap_bn.1} parent=1 // pred_check_branch
      %111 = sbr.rel (0) target = $region45
    $region44: #{posemap_bn.1} parent=1 // pred_region
      %113 = dma.done [#allocation6], 512
    $region45: #{posemap_bn.1} parent=1 // pred_fallthru
      _
    // Predicated region
    $region46: #{posemap_bn.1} parent=1 // pred_check
      _
    $region47: #{posemap_bn.1} parent=1 // pred_check_branch
      %115 = sbr.rel (0) target = $region49
    $region48: #{posemap_bn.1} parent=1 // pred_region
      %117 = dma.done [#allocation6], 32
    $region49: #{posemap_bn.1} parent=1 // pred_fallthru
      _
    // Predicated region
    $region50: #{posemap_bn.1} parent=1 // pred_check
      _
    $region51: #{posemap_bn.1} parent=1 // pred_check_branch
      %119 = sbr.rel (0) target = $region53
    $region52: #{posemap_bn.1} parent=1 // pred_region
      %121 = dma.done [#allocation9], 4096
    $region53: #{posemap_bn.1} parent=1 // pred_fallthru
      _
    // Predicated region
    $region54: #{posemap_bn.1} parent=1 // pred_check
      _
    $region55: #{posemap_bn.1} parent=1 // pred_check_branch
      %123 = sbr.rel (0) target = $region57
    $region56: #{posemap_bn.1} parent=1 // pred_region
      %125 = dma.done [#allocation9], 32
    $region57: #{posemap_bn.1} parent=1 // pred_fallthru
      _
    // Predicated region
    $region58: #{posemap_bn.1} parent=1 // pred_check
      _
    $region59: #{posemap_bn.1} parent=1 // pred_check_branch
      %127 = sbr.rel (0) target = $region61
    $region60: #{posemap_bn.1} parent=1 // pred_region
      %129 = dma.done [#allocation12], 2048
    $region61: #{posemap_bn.1} parent=1 // pred_fallthru
      _
    // Predicated region
    $region62: #{posemap_bn.1} parent=1 // pred_check
      _
    $region63: #{posemap_bn.1} parent=1 // pred_check_branch
      %131 = sbr.rel (0) target = $region65
    $region64: #{posemap_bn.1} parent=1 // pred_region
      %133 = dma.done [#allocation12], 16
    $region65: #{posemap_bn.1} parent=1 // pred_fallthru
      _
    %v135 = vld [vmem:[#allocation2] sm:$0xff]
    %v136 = vpack.c.bf16 %v135, %v135
    %v137 = vld [vmem:[#allocation5] sm:$0xff]
    %v138 = vld [vmem:[#allocation5 + $0x8] sm:$0xff]
    %v139 = vld [vmem:[#allocation5 + $0x10] sm:$0xff]
    %v140 = vld [vmem:[#allocation5 + $0x18] sm:$0xff]
    %v145 = vunpack.c.l.b16 %v137
    %v146 = vunpack.c.h.b16 %v137
    %v147 = vunpack.c.l.b16 %v138
    %v148 = vunpack.c.h.b16 %v138
    %v149 = vunpack.c.l.b16 %v139
    %v150 = vunpack.c.h.b16 %v139
    %v151 = vunpack.c.l.b16 %v140
    %v152 = vunpack.c.h.b16 %v140
    %v153 = vpack.c.b16 %v147, %v145
    %v154 = vpack.c.b16 %v148, %v146
    %v155 = vpack.c.b16 %v151, %v149
    %v156 = vpack.c.b16 %v152, %v150
    %vm161 = vcmask 261120
    %v163 = vsel %vm161, %v136, 0
    %165 = vmatpush.bf16.msra.mxu0 0
    %166 = vmatpush.bf16.msra.mxu0 0
    %167 = vmatpush.bf16.msra.mxu0 0
    %168 = vmatpush.bf16.msra.mxu0 0
    %169 = vmatpush.bf16.msra.mxu0 0
    %170 = vmatpush.bf16.msra.mxu0 0
    %171 = vmatpush.bf16.msra.mxu0 %v155
    %172 = vmatpush.bf16.msra.mxu0 %v153
    %173 = vmatmul.bf16.gmra.mxu0 %v163
    %v174 = vpop.f32.mrf.mxu0
    %v175 = vadd.f32 0.0, %v174
    %v176 = vpop.f32.mrf.mxu0
    %177 = vdwg.mxu0
    %178 = vmatpush.bf16.msra.mxu0 0
    %179 = vmatpush.bf16.msra.mxu0 0
    %180 = vmatpush.bf16.msra.mxu0 0
    %181 = vmatpush.bf16.msra.mxu0 0
    %182 = vmatpush.bf16.msra.mxu0 0
    %183 = vmatpush.bf16.msra.mxu0 0
    %184 = vmatpush.bf16.msra.mxu0 %v156
    %185 = vmatpush.bf16.msra.mxu0 %v154
    %186 = vmatmul.bf16.gmra.mxu0 %v163
    %v187 = vpop.f32.mrf.mxu0
    %v188 = vadd.f32 0.0, %v187
    %v189 = vpop.f32.mrf.mxu0
    %190 = vdwg.mxu0
    %v191 = vrot.slane %v175, 4
    %v192 = vadd.f32 %v175, %v191
    %v193 = vrot.slane %v192, 2
    %v194 = vadd.f32 %v192, %v193
    %v195 = vrot.slane %v194, 1
    %v196 = vadd.f32 %v194, %v195
    %v197 = vrot.slane %v188, 4
    %v198 = vadd.f32 %v188, %v197
    %v199 = vrot.slane %v198, 2
    %v200 = vadd.f32 %v198, %v199
    %v201 = vrot.slane %v200, 1
    %v202 = vadd.f32 %v200, %v201
    %v203 = vmul.f32 %v175, %v175
    %v204 = vmul.f32 %v188, %v188
    %v205 = vrot.slane %v203, 4
    %v206 = vadd.f32 %v203, %v205
    %v207 = vrot.slane %v206, 2
    %v208 = vadd.f32 %v206, %v207
    %v209 = vrot.slane %v208, 1
    %v210 = vadd.f32 %v208, %v209
    %v211 = vrot.slane %v204, 4
    %v212 = vadd.f32 %v204, %v211
    %v213 = vrot.slane %v212, 2
    %v214 = vadd.f32 %v212, %v213
    %v215 = vrot.slane %v214, 1
    %v216 = vadd.f32 %v214, %v215
    %v217 = vmul.f32 %v196, 0.125
    %v218 = vmul.f32 %v202, 0.125
    %v219 = vmul.f32 %v210, 0.125
    %v220 = vmul.f32 %v216, 0.125
    %v221 = vmul.f32 %v217, %v217
    %v222 = vmul.f32 %v218, %v218
    %v223 = vsub.f32 %v219, %v221
    %v224 = vsub.f32 %v220, %v222
    %v225 = vmax.f32 %v223, 0.0
    %v226 = vmax.f32 %v224, 0.0
    %v227 = vadd.f32 %v225, 1e-05
    %v228 = vadd.f32 %v226, 1e-05
    %v229 = vrsqrt.pop %v227
    %v230 = vmul.f32 %v229, %v227
    %v231 = vmul.f32 %v230, %v229
    %v232 = vmul.f32 0.5, %v231
    %v233 = vsub.f32 1.5, %v232
    %v234 = vmul.f32 %v229, %v233
    %vm235 = vweird.f32 %v227
    %vm236 = vweird.f32 %v229
    %vm237 = vmor %vm235, %vm236
    %v238 = vsel %vm237, %v229, %v234
    %v239 = vrsqrt.pop %v228
    %v240 = vmul.f32 %v239, %v228
    %v241 = vmul.f32 %v240, %v239
    %v242 = vmul.f32 0.5, %v241
    %v243 = vsub.f32 1.5, %v242
    %v244 = vmul.f32 %v239, %v243
    %vm245 = vweird.f32 %v228
    %vm246 = vweird.f32 %v239
    %vm247 = vmor %vm245, %vm246
    %v248 = vsel %vm247, %v239, %v244
    %v249 = vld [vmem:[%s2] sm:$0x3]
    %v251 = vperm.slane %v249, 0
    %v252 = vperm.slane %v249, 1
    %v255 = vmul.f32 %v238, %v251
    %v256 = vmul.f32 %v248, %v252
    %v257 = vld [vmem:[#allocation7] sm:$0x3]
    %v258 = vmul.f32 %v217, %v255
    %v259 = vmul.f32 %v218, %v256
    %v262 = vrot.slane %v259, 7
    %vm263 = vcmask 1040384
    %v264 = vsel %vm263, %v258, %v262
    %v266 = vsub.f32 %v257, %v264
    %v267 = vperm.slane %v255, 0
    %v268 = vperm.slane %v256, 0
    %v269 = vmul.f32 %v175, %v267
    %v270 = vmul.f32 %v188, %v268
    %v272 = vperm.slane %v266, 0
    %v273 = vperm.slane %v266, 1
    %v276 = vadd.f32 %v269, %v272
    %v277 = vadd.f32 %v270, %v273
    %vm278 = vcmp.ge.f32.partialorder %v276, 0.0
    %vm279 = vcmp.ge.f32.partialorder %v277, 0.0
    %v280 = vmul.f32 %v276, 0.01
    %v281 = vmul.f32 %v277, 0.01
    %v282 = vsel %vm278, %v276, %v280
    %v283 = vsel %vm279, %v277, %v281
    %v284 = vpack.c.bf16 %v282, %v282
    %v285 = vpack.c.bf16 %v283, %v283
    %v286 = vld [vmem:[#allocation8] sm:$0xff]
    %v287 = vld [vmem:[#allocation8 + $0x8] sm:$0xff]
    %v288 = vld [vmem:[#allocation8 + $0x10] sm:$0xff]
    %v289 = vld [vmem:[#allocation8 + $0x18] sm:$0xff]
    %v290 = vld [vmem:[#allocation8 + $0x20] sm:$0xff]
    %v291 = vld [vmem:[#allocation8 + $0x28] sm:$0xff]
    %v292 = vld [vmem:[#allocation8 + $0x30] sm:$0xff]
    %v293 = vld [vmem:[#allocation8 + $0x38] sm:$0xff]
    %v294 = vld [vmem:[#allocation8 + $0x40] sm:$0xff]
    %v295 = vld [vmem:[#allocation8 + $0x48] sm:$0xff]
    %v296 = vld [vmem:[#allocation8 + $0x50] sm:$0xff]
    %v297 = vld [vmem:[#allocation8 + $0x58] sm:$0xff]
    %v298 = vld [vmem:[#allocation8 + $0x60] sm:$0xff]
    %v299 = vld [vmem:[#allocation8 + $0x68] sm:$0xff]
    %v300 = vld [vmem:[#allocation8 + $0x70] sm:$0xff]
    %v301 = vld [vmem:[#allocation8 + $0x78] sm:$0xff]
    %v302 = vld [vmem:[#allocation8 + $0x80] sm:$0xff]
    %v303 = vld [vmem:[#allocation8 + $0x88] sm:$0xff]
    %v304 = vld [vmem:[#allocation8 + $0x90] sm:$0xff]
    %v305 = vld [vmem:[#allocation8 + $0x98] sm:$0xff]
    %v306 = vld [vmem:[#allocation8 + $0xa0] sm:$0xff]
    %v307 = vld [vmem:[#allocation8 + $0xa8] sm:$0xff]
    %v308 = vld [vmem:[#allocation8 + $0xb0] sm:$0xff]
    %v309 = vld [vmem:[#allocation8 + $0xb8] sm:$0xff]
    %v310 = vld [vmem:[#allocation8 + $0xc0] sm:$0xff]
    %v311 = vld [vmem:[#allocation8 + $0xc8] sm:$0xff]
    %v312 = vld [vmem:[#allocation8 + $0xd0] sm:$0xff]
    %v313 = vld [vmem:[#allocation8 + $0xd8] sm:$0xff]
    %v314 = vld [vmem:[#allocation8 + $0xe0] sm:$0xff]
    %v315 = vld [vmem:[#allocation8 + $0xe8] sm:$0xff]
    %v316 = vld [vmem:[#allocation8 + $0xf0] sm:$0xff]
    %v317 = vld [vmem:[#allocation8 + $0xf8] sm:$0xff]
    %v350 = vunpack.c.l.b16 %v286
    %v351 = vunpack.c.h.b16 %v286
    %v352 = vunpack.c.l.b16 %v287
    %v353 = vunpack.c.h.b16 %v287
    %v354 = vunpack.c.l.b16 %v288
    %v355 = vunpack.c.h.b16 %v288
    %v356 = vunpack.c.l.b16 %v289
    %v357 = vunpack.c.h.b16 %v289
    %v358 = vunpack.c.l.b16 %v290
    %v359 = vunpack.c.h.b16 %v290
    %v360 = vunpack.c.l.b16 %v291
    %v361 = vunpack.c.h.b16 %v291
    %v362 = vunpack.c.l.b16 %v292
    %v363 = vunpack.c.h.b16 %v292
    %v364 = vunpack.c.l.b16 %v293
    %v365 = vunpack.c.h.b16 %v293
    %v366 = vunpack.c.l.b16 %v294
    %v367 = vunpack.c.h.b16 %v294
    %v368 = vunpack.c.l.b16 %v295
    %v369 = vunpack.c.h.b16 %v295
    %v370 = vunpack.c.l.b16 %v296
    %v371 = vunpack.c.h.b16 %v296
    %v372 = vunpack.c.l.b16 %v297
    %v373 = vunpack.c.h.b16 %v297
    %v374 = vunpack.c.l.b16 %v298
    %v375 = vunpack.c.h.b16 %v298
    %v376 = vunpack.c.l.b16 %v299
    %v377 = vunpack.c.h.b16 %v299
    %v378 = vunpack.c.l.b16 %v300
    %v379 = vunpack.c.h.b16 %v300
    %v380 = vunpack.c.l.b16 %v301
    %v381 = vunpack.c.h.b16 %v301
    %v382 = vunpack.c.l.b16 %v302
    %v383 = vunpack.c.h.b16 %v302
    %v384 = vunpack.c.l.b16 %v303
    %v385 = vunpack.c.h.b16 %v303
    %v386 = vunpack.c.l.b16 %v304
    %v387 = vunpack.c.h.b16 %v304
    %v388 = vunpack.c.l.b16 %v305
    %v389 = vunpack.c.h.b16 %v305
    %v390 = vunpack.c.l.b16 %v306
    %v391 = vunpack.c.h.b16 %v306
    %v392 = vunpack.c.l.b16 %v307
    %v393 = vunpack.c.h.b16 %v307
    %v394 = vunpack.c.l.b16 %v308
    %v395 = vunpack.c.h.b16 %v308
    %v396 = vunpack.c.l.b16 %v309
    %v397 = vunpack.c.h.b16 %v309
    %v398 = vunpack.c.l.b16 %v310
    %v399 = vunpack.c.h.b16 %v310
    %v400 = vunpack.c.l.b16 %v311
    %v401 = vunpack.c.h.b16 %v311
    %v402 = vunpack.c.l.b16 %v312
    %v403 = vunpack.c.h.b16 %v312
    %v404 = vunpack.c.l.b16 %v313
    %v405 = vunpack.c.h.b16 %v313
    %v406 = vunpack.c.l.b16 %v314
    %v407 = vunpack.c.h.b16 %v314
    %v408 = vunpack.c.l.b16 %v315
    %v409 = vunpack.c.h.b16 %v315
    %v410 = vunpack.c.l.b16 %v316
    %v411 = vunpack.c.h.b16 %v316
    %v412 = vunpack.c.l.b16 %v317
    %v413 = vunpack.c.h.b16 %v317
    %v414 = vpack.c.b16 %v352, %v350
    %v415 = vpack.c.b16 %v353, %v351
    %v416 = vpack.c.b16 %v356, %v354
    %v417 = vpack.c.b16 %v357, %v355
    %v418 = vpack.c.b16 %v360, %v358
    %v419 = vpack.c.b16 %v361, %v359
    %v420 = vpack.c.b16 %v364, %v362
    %v421 = vpack.c.b16 %v365, %v363
    %v422 = vpack.c.b16 %v368, %v366
    %v423 = vpack.c.b16 %v369, %v367
    %v424 = vpack.c.b16 %v372, %v370
    %v425 = vpack.c.b16 %v373, %v371
    %v426 = vpack.c.b16 %v376, %v374
    %v427 = vpack.c.b16 %v377, %v375
    %v428 = vpack.c.b16 %v380, %v378
    %v429 = vpack.c.b16 %v381, %v379
    %v430 = vpack.c.b16 %v384, %v382
    %v431 = vpack.c.b16 %v385, %v383
    %v432 = vpack.c.b16 %v388, %v386
    %v433 = vpack.c.b16 %v389, %v387
    %v434 = vpack.c.b16 %v392, %v390
    %v435 = vpack.c.b16 %v393, %v391
    %v436 = vpack.c.b16 %v396, %v394
    %v437 = vpack.c.b16 %v397, %v395
    %v438 = vpack.c.b16 %v400, %v398
    %v439 = vpack.c.b16 %v401, %v399
    %v440 = vpack.c.b16 %v404, %v402
    %v441 = vpack.c.b16 %v405, %v403
    %v442 = vpack.c.b16 %v408, %v406
    %v443 = vpack.c.b16 %v409, %v407
    %v444 = vpack.c.b16 %v412, %v410
    %v445 = vpack.c.b16 %v413, %v411
    %478 = vmatpush.bf16.msra.mxu0 %v428
    %479 = vmatpush.bf16.msra.mxu0 %v426
    %480 = vmatpush.bf16.msra.mxu0 %v424
    %481 = vmatpush.bf16.msra.mxu0 %v422
    %482 = vmatpush.bf16.msra.mxu0 %v420
    %483 = vmatpush.bf16.msra.mxu0 %v418
    %484 = vmatpush.bf16.msra.mxu0 %v416
    %485 = vmatpush.bf16.msra.mxu0 %v414
    %486 = vmatmul.bf16.gmra.mxu0 %v284
    %v487 = vpop.f32.mrf.mxu0
    %v488 = vadd.f32 0.0, %v487
    %v489 = vpop.f32.mrf.mxu0
    %490 = vdwg.mxu0
    %491 = vmatpush.bf16.msra.mxu0 %v444
    %492 = vmatpush.bf16.msra.mxu0 %v442
    %493 = vmatpush.bf16.msra.mxu0 %v440
    %494 = vmatpush.bf16.msra.mxu0 %v438
    %495 = vmatpush.bf16.msra.mxu0 %v436
    %496 = vmatpush.bf16.msra.mxu0 %v434
    %497 = vmatpush.bf16.msra.mxu0 %v432
    %498 = vmatpush.bf16.msra.mxu0 %v430
    %499 = vmatmul.bf16.gmra.mxu0 %v285
    %v500 = vpop.f32.mrf.mxu0
    %v501 = vadd.f32 %v488, %v500
    %v502 = vpop.f32.mrf.mxu0
    %503 = vdwg.mxu0
    %504 = vmatpush.bf16.msra.mxu0 %v429
    %505 = vmatpush.bf16.msra.mxu0 %v427
    %506 = vmatpush.bf16.msra.mxu0 %v425
    %507 = vmatpush.bf16.msra.mxu0 %v423
    %508 = vmatpush.bf16.msra.mxu0 %v421
    %509 = vmatpush.bf16.msra.mxu0 %v419
    %510 = vmatpush.bf16.msra.mxu0 %v417
    %511 = vmatpush.bf16.msra.mxu0 %v415
    %512 = vmatmul.bf16.gmra.mxu0 %v284
    %v513 = vpop.f32.mrf.mxu0
    %v514 = vadd.f32 0.0, %v513
    %v515 = vpop.f32.mrf.mxu0
    %516 = vdwg.mxu0
    %517 = vmatpush.bf16.msra.mxu0 %v445
    %518 = vmatpush.bf16.msra.mxu0 %v443
    %519 = vmatpush.bf16.msra.mxu0 %v441
    %520 = vmatpush.bf16.msra.mxu0 %v439
    %521 = vmatpush.bf16.msra.mxu0 %v437
    %522 = vmatpush.bf16.msra.mxu0 %v435
    %523 = vmatpush.bf16.msra.mxu0 %v433
    %524 = vmatpush.bf16.msra.mxu0 %v431
    %525 = vmatmul.bf16.gmra.mxu0 %v285
    %v526 = vpop.f32.mrf.mxu0
    %v527 = vadd.f32 %v514, %v526
    %v528 = vpop.f32.mrf.mxu0
    %529 = vdwg.mxu0
    %v530 = vrot.slane %v501, 4
    %v531 = vadd.f32 %v501, %v530
    %v532 = vrot.slane %v531, 2
    %v533 = vadd.f32 %v531, %v532
    %v534 = vrot.slane %v533, 1
    %v535 = vadd.f32 %v533, %v534
    %v536 = vrot.slane %v527, 4
    %v537 = vadd.f32 %v527, %v536
    %v538 = vrot.slane %v537, 2
    %v539 = vadd.f32 %v537, %v538
    %v540 = vrot.slane %v539, 1
    %v541 = vadd.f32 %v539, %v540
    %v542 = vmul.f32 %v501, %v501
    %v543 = vmul.f32 %v527, %v527
    %v544 = vrot.slane %v542, 4
    %v545 = vadd.f32 %v542, %v544
    %v546 = vrot.slane %v545, 2
    %v547 = vadd.f32 %v545, %v546
    %v548 = vrot.slane %v547, 1
    %v549 = vadd.f32 %v547, %v548
    %v550 = vrot.slane %v543, 4
    %v551 = vadd.f32 %v543, %v550
    %v552 = vrot.slane %v551, 2
    %v553 = vadd.f32 %v551, %v552
    %v554 = vrot.slane %v553, 1
    %v555 = vadd.f32 %v553, %v554
    %v556 = vmul.f32 %v535, 0.125
    %v557 = vmul.f32 %v541, 0.125
    %v558 = vmul.f32 %v549, 0.125
    %v559 = vmul.f32 %v555, 0.125
    %v560 = vmul.f32 %v556, %v556
    %v561 = vmul.f32 %v557, %v557
    %v562 = vsub.f32 %v558, %v560
    %v563 = vsub.f32 %v559, %v561
    %v564 = vmax.f32 %v562, 0.0
    %v565 = vmax.f32 %v563, 0.0
    %v566 = vadd.f32 %v564, 1e-05
    %v567 = vadd.f32 %v565, 1e-05
    %v568 = vrsqrt.pop %v566
    %v569 = vmul.f32 %v568, %v566
    %v570 = vmul.f32 %v569, %v568
    %v571 = vmul.f32 0.5, %v570
    %v572 = vsub.f32 1.5, %v571
    %v573 = vmul.f32 %v568, %v572
    %vm574 = vweird.f32 %v566
    %vm575 = vweird.f32 %v568
    %vm576 = vmor %vm574, %vm575
    %v577 = vsel %vm576, %v568, %v573
    %v578 = vrsqrt.pop %v567
    %v579 = vmul.f32 %v578, %v567
    %v580 = vmul.f32 %v579, %v578
    %v581 = vmul.f32 0.5, %v580
    %v582 = vsub.f32 1.5, %v581
    %v583 = vmul.f32 %v578, %v582
    %vm584 = vweird.f32 %v567
    %vm585 = vweird.f32 %v578
    %vm586 = vmor %vm584, %vm585
    %v587 = vsel %vm586, %v578, %v583
    %v588 = vld [vmem:[%s5] sm:$0x3]
    %v590 = vperm.slane %v588, 0
    %v591 = vperm.slane %v588, 1
    %v594 = vmul.f32 %v577, %v590
    %v595 = vmul.f32 %v587, %v591
    %v596 = vld [vmem:[#allocation10] sm:$0x3]
    %v597 = vmul.f32 %v556, %v594
    %v598 = vmul.f32 %v557, %v595
    %v601 = vrot.slane %v598, 7
    %v602 = vsel %vm263, %v597, %v601
    %v604 = vsub.f32 %v596, %v602
    %v605 = vperm.slane %v594, 0
    %v606 = vperm.slane %v595, 0
    %v607 = vmul.f32 %v501, %v605
    %v608 = vmul.f32 %v527, %v606
    %v610 = vperm.slane %v604, 0
    %v611 = vperm.slane %v604, 1
    %v614 = vadd.f32 %v607, %v610
    %v615 = vadd.f32 %v608, %v611
    %vm616 = vcmp.ge.f32.partialorder %v614, 0.0
    %vm617 = vcmp.ge.f32.partialorder %v615, 0.0
    %v618 = vmul.f32 %v614, 0.01
    %v619 = vmul.f32 %v615, 0.01
    %v620 = vsel %vm616, %v614, %v618
    %v621 = vsel %vm617, %v615, %v619
    %v622 = vpack.c.bf16 %v620, %v620
    %v623 = vpack.c.bf16 %v621, %v621
    %v624 = vld [vmem:[#allocation11] sm:$0xf]
    %v625 = vld [vmem:[#allocation11 + $0x4] sm:$0xf]
    %v626 = vld [vmem:[#allocation11 + $0x8] sm:$0xf]
    %v627 = vld [vmem:[#allocation11 + $0xc] sm:$0xf]
    %v628 = vld [vmem:[#allocation11 + $0x10] sm:$0xf]
    %v629 = vld [vmem:[#allocation11 + $0x14] sm:$0xf]
    %v630 = vld [vmem:[#allocation11 + $0x18] sm:$0xf]
    %v631 = vld [vmem:[#allocation11 + $0x1c] sm:$0xf]
    %v632 = vld [vmem:[#allocation11 + $0x20] sm:$0xf]
    %v633 = vld [vmem:[#allocation11 + $0x24] sm:$0xf]
    %v634 = vld [vmem:[#allocation11 + $0x28] sm:$0xf]
    %v635 = vld [vmem:[#allocation11 + $0x2c] sm:$0xf]
    %v636 = vld [vmem:[#allocation11 + $0x30] sm:$0xf]
    %v637 = vld [vmem:[#allocation11 + $0x34] sm:$0xf]
    %v638 = vld [vmem:[#allocation11 + $0x38] sm:$0xf]
    %v639 = vld [vmem:[#allocation11 + $0x3c] sm:$0xf]
    %v640 = vld [vmem:[#allocation11 + $0x40] sm:$0xf]
    %v641 = vld [vmem:[#allocation11 + $0x44] sm:$0xf]
    %v642 = vld [vmem:[#allocation11 + $0x48] sm:$0xf]
    %v643 = vld [vmem:[#allocation11 + $0x4c] sm:$0xf]
    %v644 = vld [vmem:[#allocation11 + $0x50] sm:$0xf]
    %v645 = vld [vmem:[#allocation11 + $0x54] sm:$0xf]
    %v646 = vld [vmem:[#allocation11 + $0x58] sm:$0xf]
    %v647 = vld [vmem:[#allocation11 + $0x5c] sm:$0xf]
    %v648 = vld [vmem:[#allocation11 + $0x60] sm:$0xf]
    %v649 = vld [vmem:[#allocation11 + $0x64] sm:$0xf]
    %v650 = vld [vmem:[#allocation11 + $0x68] sm:$0xf]
    %v651 = vld [vmem:[#allocation11 + $0x6c] sm:$0xf]
    %v652 = vld [vmem:[#allocation11 + $0x70] sm:$0xf]
    %v653 = vld [vmem:[#allocation11 + $0x74] sm:$0xf]
    %v654 = vld [vmem:[#allocation11 + $0x78] sm:$0xf]
    %v655 = vld [vmem:[#allocation11 + $0x7c] sm:$0xf]
    %v656 = vld [vmem:[#allocation13] sm:$0x1]
    %v658 = vperm.slane %v656, 0
    %v692 = vunpack.c.l.b16 %v624
    %v693 = vunpack.c.l.b16 %v625
    %v694 = vunpack.c.l.b16 %v626
    %v695 = vunpack.c.l.b16 %v627
    %v696 = vunpack.c.l.b16 %v628
    %v697 = vunpack.c.l.b16 %v629
    %v698 = vunpack.c.l.b16 %v630
    %v699 = vunpack.c.l.b16 %v631
    %v700 = vunpack.c.l.b16 %v632
    %v701 = vunpack.c.l.b16 %v633
    %v702 = vunpack.c.l.b16 %v634
    %v703 = vunpack.c.l.b16 %v635
    %v704 = vunpack.c.l.b16 %v636
    %v705 = vunpack.c.l.b16 %v637
    %v706 = vunpack.c.l.b16 %v638
    %v707 = vunpack.c.l.b16 %v639
    %v708 = vunpack.c.l.b16 %v640
    %v709 = vunpack.c.l.b16 %v641
    %v710 = vunpack.c.l.b16 %v642
    %v711 = vunpack.c.l.b16 %v643
    %v712 = vunpack.c.l.b16 %v644
    %v713 = vunpack.c.l.b16 %v645
    %v714 = vunpack.c.l.b16 %v646
    %v715 = vunpack.c.l.b16 %v647
    %v716 = vunpack.c.l.b16 %v648
    %v717 = vunpack.c.l.b16 %v649
    %v718 = vunpack.c.l.b16 %v650
    %v719 = vunpack.c.l.b16 %v651
    %v720 = vunpack.c.l.b16 %v652
    %v721 = vunpack.c.l.b16 %v653
    %v722 = vunpack.c.l.b16 %v654
    %v723 = vunpack.c.l.b16 %v655
    %v724 = vpack.c.b16 %v693, %v692
    %v725 = vpack.c.b16 %v695, %v694
    %v726 = vpack.c.b16 %v697, %v696
    %v727 = vpack.c.b16 %v699, %v698
    %v728 = vpack.c.b16 %v701, %v700
    %v729 = vpack.c.b16 %v703, %v702
    %v730 = vpack.c.b16 %v705, %v704
    %v731 = vpack.c.b16 %v707, %v706
    %v732 = vpack.c.b16 %v709, %v708
    %v733 = vpack.c.b16 %v711, %v710
    %v734 = vpack.c.b16 %v713, %v712
    %v735 = vpack.c.b16 %v715, %v714
    %v736 = vpack.c.b16 %v717, %v716
    %v737 = vpack.c.b16 %v719, %v718
    %v738 = vpack.c.b16 %v721, %v720
    %v739 = vpack.c.b16 %v723, %v722
    %756 = vmatpush.bf16.msra.mxu0 %v731
    %757 = vmatpush.bf16.msra.mxu0 %v730
    %758 = vmatpush.bf16.msra.mxu0 %v729
    %759 = vmatpush.bf16.msra.mxu0 %v728
    %760 = vmatpush.bf16.msra.mxu0 %v727
    %761 = vmatpush.bf16.msra.mxu0 %v726
    %762 = vmatpush.bf16.msra.mxu0 %v725
    %763 = vmatpush.bf16.msra.mxu0 %v724
    %764 = vmatmul.bf16.gmra.mxu0 %v622
    %v765 = vpop.f32.mrf.mxu0
    %v766 = vadd.f32 %v658, %v765
    %v767 = vpop.f32.mrf.mxu0
    %768 = vdwg.mxu0
    %769 = vmatpush.bf16.msra.mxu0 %v739
    %770 = vmatpush.bf16.msra.mxu0 %v738
    %771 = vmatpush.bf16.msra.mxu0 %v737
    %772 = vmatpush.bf16.msra.mxu0 %v736
    %773 = vmatpush.bf16.msra.mxu0 %v735
    %774 = vmatpush.bf16.msra.mxu0 %v734
    %775 = vmatpush.bf16.msra.mxu0 %v733
    %776 = vmatpush.bf16.msra.mxu0 %v732
    %777 = vmatmul.bf16.gmra.mxu0 %v623
    %v778 = vpop.f32.mrf.mxu0
    %v779 = vadd.f32 %v766, %v778
    %v780 = vpop.f32.mrf.mxu0
    %781 = vdwg.mxu0
    %782 = vst [vmem:[#allocation14] sm:$0xff] %v779
    // Predicated region
    $region66: #{posemap_bn.1} parent=1 // pred_check
      _
    $region67: #{posemap_bn.1} parent=1 // pred_check_branch
      %784 = sbr.rel (0) target = $region69
    $region68: #{posemap_bn.1} parent=1 // pred_region
      %786 = vsyncadd [#allocation4], 0
      %s788 = sshll.u32 [#allocation14], 4
      %s789 = int_to_ptr.vmem [resolvable:$true] %s788
      %s790 = sshll.u32 %s9, 4
      %s791 = int_to_ptr.hbm [resolvable:$true] %s790
      %793 = dma.vmem_to_hbm [thread:$0]  %s789, 128, %s791, [#allocation4]
    $region69: #{posemap_bn.1} parent=1 // pred_fallthru
      _
    // Predicated region
    $region70: #{posemap_bn.1} parent=1 // pred_check
      _
    $region71: #{posemap_bn.1} parent=1 // pred_check_branch
      %795 = sbr.rel (0) target = $region73
    $region72: #{posemap_bn.1} parent=1 // pred_region
      %797 = dma.done [#allocation4], 128
    $region73: #{posemap_bn.1} parent=1 // pred_fallthru
      _
    %798 = vsyncpa [#allocation3], 1
    %799 = vsyncpa [#allocation6], 1
    %800 = vsyncpa [#allocation9], 1
    %801 = vsyncpa [#allocation12], 1
    %802 = vsyncpa [#allocation4], 1

</llo_original>
